<compile_context>
chip_gen: v5e
topology: v5e:2x2
jax: 0.10.0
libtpu: 0.0.40
codegen_flags: <defaults>
</compile_context>

<pallas_src>
import functools

import jax
import jax.numpy as jnp
from jax.experimental import pallas as pl
from jax.experimental.pallas import tpu as pltpu

GAMMA = 1e-10
NEG_LOG_GAMMA = 23.025850929940457   # -log(GAMMA): gamma saturation cap
LANES = 128
SUBLANES = 8
NUM_CORES = 2                        # leading "parallel" axis (v7x megacore)


def _round_up(x, m):
    return (x + m - 1) // m * m


def _ntr_loss_kernel(w_ref, pos_ref, neg_ref, out_ref, acc_ref, *,
                     n, tr, steps, full_tiles, any_mask):
    # w_ref:   SMEM (2,)             [pos_weight, neg_weight]
    # pos_ref: VMEM (tr, 128)        positive-score tile (native dtype)
    # neg_ref: VMEM (tr, 128)        negative-score tile (native dtype)
    # out_ref: VMEM (1, 8, 128)      per-core weighted partial sums
    # acc_ref: VMEM (8, 128) f32     single-vreg accumulator
    c = pl.program_id(0)          # parallel (core) axis
    j = pl.program_id(1)          # arbitrary (reduction) axis
    tile_idx = c * steps + j      # linear row-tile index

    @pl.when(j == 0)
    def _init():
        acc_ref[...] = jnp.zeros_like(acc_ref)

    pw = w_ref[0]
    nw = w_ref[1]

    pos = pos_ref[...].astype(jnp.float32)
    neg = neg_ref[...].astype(jnp.float32)

    # f(x) = -log(GAMMA + sigmoid(x)) == min(softplus(-x), -log(GAMMA))
    # softplus(z) = max(z, 0) + log(1 + exp(-|z|)): one exp + one log per term.
    f_pos = jnp.maximum(-pos, 0.0) + jnp.log(1.0 + jnp.exp(-jnp.abs(pos)))
    f_neg = jnp.maximum(neg, 0.0) + jnp.log(1.0 + jnp.exp(-jnp.abs(neg)))
    f_pos = jnp.minimum(f_pos, NEG_LOG_GAMMA)
    f_neg = jnp.minimum(f_neg, NEG_LOG_GAMMA)

    # Fused weighted accumulator (the 2 extra vmuls ride in VALU slack).
    contrib = pw * f_pos + nw * f_neg

    def _accumulate(x):
        # Pre-reduce the (tr, 128) tile over the sublane-tile axis so the
        # running accumulator is a single vreg.
        acc_ref[...] += x.reshape(tr // SUBLANES, SUBLANES, LANES).sum(axis=0)

    if any_mask:
        # Only tiles at/after `full_tiles` can contain invalid (padded or
        # undefined edge-block) lanes; keep the mask work off full tiles.
        @pl.when(tile_idx >= full_tiles)
        def _masked():
            rows_i = jax.lax.broadcasted_iota(jnp.int32, (tr, LANES), 0)
            cols_i = jax.lax.broadcasted_iota(jnp.int32, (tr, LANES), 1)
            flat = (tile_idx * tr + rows_i) * LANES + cols_i
            _accumulate(jnp.where(flat < n, contrib, 0.0))

        @pl.when(tile_idx < full_tiles)
        def _plain():
            _accumulate(contrib)
    else:
        _accumulate(contrib)

    @pl.when(j == steps - 1)
    def _finalize():
        out_ref[...] = acc_ref[...][None].astype(out_ref.dtype)


def not_to_recommend_loss(pos_score, neg_score, pos_weight, neg_weight,
                          *, block_rows=2048):
    """Pallas implementation of NotToRecommendLoss.forward.

    pos_score, neg_score: (N,) float arrays (any float dtype; widened to f32
        in-kernel — stream bf16 to halve HBM bytes).
    pos_weight, neg_weight: scalar learnable parameters.
    Returns: scalar float32 loss.
    """
    assert pos_score.shape == neg_score.shape and pos_score.ndim == 1
    n = pos_score.shape[0]
    assert n > 0

    # Lane-dense (rows, 128) view. Free bitcast when N % 128 == 0; otherwise a
    # small pad to the next (8*128) boundary (tail handled by in-kernel mask).
    if n % LANES == 0:
        pad = 0
    else:
        pad = _round_up(n, SUBLANES * LANES) - n
    if pad:
        pos_score = jnp.pad(pos_score, (0, pad))
        neg_score = jnp.pad(neg_score, (0, pad))
    rows = (n + pad) // LANES
    pos2d = pos_score.reshape(rows, LANES)
    neg2d = neg_score.reshape(rows, LANES)

    tr = min(_round_up(block_rows, SUBLANES), _round_up(rows, SUBLANES))
    tiles = pl.cdiv(rows, tr)                       # real row tiles
    steps = pl.cdiv(tiles, NUM_CORES)               # tiles per core
    full_tiles = n // (tr * LANES)                  # tiles with no invalid lane
    any_mask = NUM_CORES * steps * tr * LANES > n   # any tile needs masking?

    if NUM_CORES * steps == tiles:
        def data_map(c, j):
            return (c * steps + j, 0)
    else:
        # Clamp out-of-range tile indices to the last real tile; their
        # (duplicated) data is zeroed by the tile_idx-based mask in-kernel.
        def data_map(c, j):
            return (jnp.minimum(c * steps + j, tiles - 1), 0)

    weights = jnp.stack([jnp.asarray(pos_weight, jnp.float32),
                         jnp.asarray(neg_weight, jnp.float32)])

    kernel = functools.partial(
        _ntr_loss_kernel, n=n, tr=tr, steps=steps,
        full_tiles=full_tiles, any_mask=any_mask)

    itemsize = jnp.dtype(pos2d.dtype).itemsize
    cost = pl.CostEstimate(
        flops=12 * n,
        transcendentals=4 * n,
        bytes_accessed=2 * (n + pad) * itemsize
        + NUM_CORES * SUBLANES * LANES * 4)

    partials = pl.pallas_call(
        kernel,
        out_shape=jax.ShapeDtypeStruct((NUM_CORES, SUBLANES, LANES),
                                       jnp.float32),
        grid=(NUM_CORES, steps),
        in_specs=[
            pl.BlockSpec(memory_space=pltpu.MemorySpace.SMEM),  # weights (2,)
            pl.BlockSpec((tr, LANES), data_map),                # pos tile
            pl.BlockSpec((tr, LANES), data_map),                # neg tile
        ],
        out_specs=pl.BlockSpec((1, SUBLANES, LANES), lambda c, j: (c, 0, 0)),
        scratch_shapes=[pltpu.VMEM((SUBLANES, LANES), jnp.float32)],
        compiler_params=pltpu.CompilerParams(
            dimension_semantics=("parallel", "arbitrary")),
        cost_estimate=cost,
    )(weights, pos2d, neg2d)

    pw = jnp.asarray(pos_weight, jnp.float32)
    nw = jnp.asarray(neg_weight, jnp.float32)
    # partials already carry the pw/nw weighting; finish with mean + normalize.
    return (jnp.sum(partials) * (1.0 / n)) / (pw + nw)


if __name__ == "__main__":
    def reference(pos, neg, pw, nw):
        pos_loss = -jnp.mean(jnp.log(GAMMA + jax.nn.sigmoid(pos)))
        neg_loss = -jnp.mean(jnp.log(1.0 - jax.nn.sigmoid(neg) + GAMMA))
        return (pw * pos_loss + nw * neg_loss) / (pw + nw)

    key = jax.random.PRNGKey(0)
    cases = (
        # (N, block_rows, pos_weight, neg_weight)
        (300, 2048, 1.0, 1.0),    # mask/pad path, single tile
        (1024, 2048, 1.0, 1.0),   # no-pad (free reshape) path
        (6000, 8, 1.25, 0.5),     # multi-step grid + both mask branches
    )
    for n, brows, pw_v, nw_v in cases:
        key, k1, k2 = jax.random.split(key, 3)
        pos = jax.random.normal(k1, (n,), dtype=jnp.float32)
        neg = jax.random.normal(k2, (n,), dtype=jnp.float32)
        pw = jnp.float32(pw_v)
        nw = jnp.float32(nw_v)
        loss = not_to_recommend_loss(pos, neg, pw, nw, block_rows=brows)
        loss = jax.block_until_ready(loss)
        ref = reference(pos, neg, pw, nw)
        assert jnp.allclose(loss, ref, rtol=1e-5, atol=1e-6), (n, loss, ref)

    print("KERNEL_OK")
</pallas_src>

<mosaic_0001>
module attributes {stable_mosaic.version = 11 : i64} {
  func.func @_ntr_loss_kernel(%arg0: i32, %arg1: i32, %arg2: memref<2xf32, #tpu.memory_space<smem>>, %arg3: memref<8x128xf32, #tpu.memory_space<vmem>>, %arg4: memref<8x128xf32, #tpu.memory_space<vmem>>, %arg5: memref<1x8x128xf32, #tpu.memory_space<vmem>>, %arg6: memref<8x128xf32, #tpu.memory_space<vmem>>) attributes {dimension_semantics = [#tpu.dimension_semantics<parallel>, #tpu.dimension_semantics<arbitrary>], iteration_bounds = array<i64: 2, 1>, scalar_prefetch = 0 : i64, scratch_operands = 1 : i64, tpu.core_type = #tpu.core_type<tc>, window_params = [{transform_indices = @transform_0, window_bounds = array<i64: 2>}, {transform_indices = @transform_1, window_bounds = array<i64: 8, 128>}, {transform_indices = @transform_2, window_bounds = array<i64: 8, 128>}, {transform_indices = @transform_3, window_bounds = array<i64: 1, 8, 128>}]} {
    %c1_i32 = arith.constant 1 : i32
    %0 = arith.muli %arg0, %c1_i32 : i32
    %1 = arith.addi %0, %arg1 : i32
    %c0_i32 = arith.constant 0 : i32
    %2 = arith.cmpi eq, %arg1, %c0_i32 : i32
    %3 = arith.extui %2 : i1 to i32
    %c0_i32_0 = arith.constant 0 : i32
    %4 = arith.cmpi ne, %3, %c0_i32_0 : i32
    scf.if %4 {
      %cst_19 = arith.constant 0.000000e+00 : f32
      %49 = vector.broadcast %cst_19 : f32 to vector<8x128xf32>
      %c0_20 = arith.constant 0 : index
      %c0_21 = arith.constant 0 : index
      %50 = vector.load %arg6[%c0_20, %c0_21] : memref<8x128xf32, #tpu.memory_space<vmem>>, vector<8x128xf32>
      tpu.vector_store %arg6[%c0_20, %c0_21], %49 {strides = array<i32>} : memref<8x128xf32, #tpu.memory_space<vmem>>, vector<8x128xf32>,
    } else {
    }
    %c0 = arith.constant 0 : index
    %5 = memref.load %arg2[%c0] : memref<2xf32, #tpu.memory_space<smem>>
    %c1 = arith.constant 1 : index
    %6 = memref.load %arg2[%c1] : memref<2xf32, #tpu.memory_space<smem>>
    %c0_1 = arith.constant 0 : index
    %c0_2 = arith.constant 0 : index
    %7 = vector.load %arg3[%c0_1, %c0_2] : memref<8x128xf32, #tpu.memory_space<vmem>>, vector<8x128xf32>
    %c0_3 = arith.constant 0 : index
    %c0_4 = arith.constant 0 : index
    %8 = vector.load %arg4[%c0_3, %c0_4] : memref<8x128xf32, #tpu.memory_space<vmem>>, vector<8x128xf32>
    %cst = arith.constant 0.000000e+00 : f32
    %9 = vector.broadcast %cst : f32 to vector<8x128xf32>
    %10 = arith.subf %9, %7 : vector<8x128xf32>
    %cst_5 = arith.constant 0.000000e+00 : f32
    %11 = vector.broadcast %cst_5 : f32 to vector<8x128xf32>
    %12 = arith.maximumf %10, %11 : vector<8x128xf32>
    %13 = math.absf %7 : vector<8x128xf32>
    %cst_6 = arith.constant 0.000000e+00 : f32
    %14 = vector.broadcast %cst_6 : f32 to vector<8x128xf32>
    %15 = arith.subf %14, %13 : vector<8x128xf32>
    %16 = math.exp %15 : vector<8x128xf32>
    %cst_7 = arith.constant 1.000000e+00 : f32
    %17 = vector.broadcast %cst_7 : f32 to vector<8x128xf32>
    %18 = arith.addf %17, %16 : vector<8x128xf32>
    %19 = math.log %18 : vector<8x128xf32>
    %20 = arith.addf %12, %19 : vector<8x128xf32>
    %cst_8 = arith.constant 0.000000e+00 : f32
    %21 = vector.broadcast %cst_8 : f32 to vector<8x128xf32>
    %22 = arith.maximumf %8, %21 : vector<8x128xf32>
    %23 = math.absf %8 : vector<8x128xf32>
    %cst_9 = arith.constant 0.000000e+00 : f32
    %24 = vector.broadcast %cst_9 : f32 to vector<8x128xf32>
    %25 = arith.subf %24, %23 : vector<8x128xf32>
    %26 = math.exp %25 : vector<8x128xf32>
    %cst_10 = arith.constant 1.000000e+00 : f32
    %27 = vector.broadcast %cst_10 : f32 to vector<8x128xf32>
    %28 = arith.addf %27, %26 : vector<8x128xf32>
    %29 = math.log %28 : vector<8x128xf32>
    %30 = arith.addf %22, %29 : vector<8x128xf32>
    %cst_11 = arith.constant 23.0258503 : f32
    %31 = vector.broadcast %cst_11 : f32 to vector<8x128xf32>
    %32 = arith.minimumf %20, %31 : vector<8x128xf32>
    %cst_12 = arith.constant 23.0258503 : f32
    %33 = vector.broadcast %cst_12 : f32 to vector<8x128xf32>
    %34 = arith.minimumf %30, %33 : vector<8x128xf32>
    %35 = vector.broadcast %5 : f32 to vector<8x128xf32>
    %36 = arith.mulf %35, %32 : vector<8x128xf32>
    %37 = vector.broadcast %6 : f32 to vector<8x128xf32>
    %38 = arith.mulf %37, %34 : vector<8x128xf32>
    %39 = arith.addf %36, %38 : vector<8x128xf32>
    %c0_i32_13 = arith.constant 0 : i32
    %40 = arith.cmpi sge, %1, %c0_i32_13 : i32
    %41 = arith.extui %40 : i1 to i32
    %c0_i32_14 = arith.constant 0 : i32
    %42 = arith.cmpi ne, %41, %c0_i32_14 : i32
    scf.if %42 {
      %49 = tpu.iota {dimensions = array<i32: 0>} : vector<8x128xi32>
      %50 = tpu.iota {dimensions = array<i32: 1>} : vector<8x128xi32>
      %c8_i32 = arith.constant 8 : i32
      %51 = arith.muli %1, %c8_i32 : i32
      %52 = vector.broadcast %51 : i32 to vector<8x128xi32>
      %53 = arith.addi %52, %49 : vector<8x128xi32>
      %c128_i32 = arith.constant 128 : i32
      %54 = vector.broadcast %c128_i32 : i32 to vector<8x128xi32>
      %55 = arith.muli %53, %54 : vector<8x128xi32>
      %56 = arith.addi %55, %50 : vector<8x128xi32>
      %c300_i32 = arith.constant 300 : i32
      %57 = vector.broadcast %c300_i32 : i32 to vector<8x128xi32>
      %58 = arith.cmpi slt, %56, %57 : vector<8x128xi32>
      %cst_19 = arith.constant 0.000000e+00 : f32
      %59 = vector.broadcast %cst_19 : f32 to vector<8x128xf32>
      %60 = arith.select %58, %39, %59 : vector<8x128xi1>, vector<8x128xf32>
      %c0_20 = arith.constant 0 : index
      %c0_21 = arith.constant 0 : index
      %61 = vector.load %arg6[%c0_20, %c0_21] : memref<8x128xf32, #tpu.memory_space<vmem>>, vector<8x128xf32>
      %62 = vector.shape_cast %60 : vector<8x128xf32> to vector<1x8x128xf32>
      %cst_22 = arith.constant dense<0.000000e+00> : vector<8x128xf32>
      %63 = vector.multi_reduction <add>, %62, %cst_22 [0] : vector<1x8x128xf32> to vector<8x128xf32>
      %64 = arith.addf %61, %63 : vector<8x128xf32>
      %c0_23 = arith.constant 0 : index
      %c0_24 = arith.constant 0 : index
      %65 = vector.load %arg6[%c0_23, %c0_24] : memref<8x128xf32, #tpu.memory_space<vmem>>, vector<8x128xf32>
      tpu.vector_store %arg6[%c0_23, %c0_24], %64 {strides = array<i32>} : memref<8x128xf32, #tpu.memory_space<vmem>>, vector<8x128xf32>,
    } else {
    }
    %c0_i32_15 = arith.constant 0 : i32
    %43 = arith.cmpi slt, %1, %c0_i32_15 : i32
    %44 = arith.extui %43 : i1 to i32
    %c0_i32_16 = arith.constant 0 : i32
    %45 = arith.cmpi ne, %44, %c0_i32_16 : i32
    scf.if %45 {
      %c0_19 = arith.constant 0 : index
      %c0_20 = arith.constant 0 : index
      %49 = vector.load %arg6[%c0_19, %c0_20] : memref<8x128xf32, #tpu.memory_space<vmem>>, vector<8x128xf32>
      %50 = vector.shape_cast %39 : vector<8x128xf32> to vector<1x8x128xf32>
      %cst_21 = arith.constant dense<0.000000e+00> : vector<8x128xf32>
      %51 = vector.multi_reduction <add>, %50, %cst_21 [0] : vector<1x8x128xf32> to vector<8x128xf32>
      %52 = arith.addf %49, %51 : vector<8x128xf32>
      %c0_22 = arith.constant 0 : index
      %c0_23 = arith.constant 0 : index
      %53 = vector.load %arg6[%c0_22, %c0_23] : memref<8x128xf32, #tpu.memory_space<vmem>>, vector<8x128xf32>
      tpu.vector_store %arg6[%c0_22, %c0_23], %52 {strides = array<i32>} : memref<8x128xf32, #tpu.memory_space<vmem>>, vector<8x128xf32>,
    } else {
    }
    %c0_i32_17 = arith.constant 0 : i32
    %46 = arith.cmpi eq, %arg1, %c0_i32_17 : i32
    %47 = arith.extui %46 : i1 to i32
    %c0_i32_18 = arith.constant 0 : i32
    %48 = arith.cmpi ne, %47, %c0_i32_18 : i32
    scf.if %48 {
      %c0_19 = arith.constant 0 : index
      %c0_20 = arith.constant 0 : index
      %49 = vector.load %arg6[%c0_19, %c0_20] : memref<8x128xf32, #tpu.memory_space<vmem>>, vector<8x128xf32>
      %50 = vector.shape_cast %49 : vector<8x128xf32> to vector<1x8x128xf32>
      %c0_21 = arith.constant 0 : index
      %c0_22 = arith.constant 0 : index
      %c0_23 = arith.constant 0 : index
      %51 = vector.load %arg5[%c0_21, %c0_22, %c0_23] : memref<1x8x128xf32, #tpu.memory_space<vmem>>, vector<1x8x128xf32>
      tpu.vector_store %arg5[%c0_21, %c0_22, %c0_23], %50 {strides = array<i32>} : memref<1x8x128xf32, #tpu.memory_space<vmem>>, vector<1x8x128xf32>,
    } else {
    }
    return
  }
  func.func @transform_0(%arg0: i32, %arg1: i32) -> i32 {
    %c0_i32 = arith.constant 0 : i32
    %c0_i32_0 = arith.constant 0 : i32
    return %c0_i32 : i32
  }
  func.func @transform_1(%arg0: i32, %arg1: i32) -> (i32, i32) {
    %c1_i32 = arith.constant 1 : i32
    %0 = arith.muli %arg0, %c1_i32 : i32
    %1 = arith.addi %0, %arg1 : i32
    %c0_i32 = arith.constant 0 : i32
    %2 = arith.minsi %1, %c0_i32 : i32
    %c0_i32_0 = arith.constant 0 : i32
    %c0_i32_1 = arith.constant 0 : i32
    return %2, %c0_i32_0 : i32, i32
  }
  func.func @transform_2(%arg0: i32, %arg1: i32) -> (i32, i32) {
    %c1_i32 = arith.constant 1 : i32
    %0 = arith.muli %arg0, %c1_i32 : i32
    %1 = arith.addi %0, %arg1 : i32
    %c0_i32 = arith.constant 0 : i32
    %2 = arith.minsi %1, %c0_i32 : i32
    %c0_i32_0 = arith.constant 0 : i32
    %c0_i32_1 = arith.constant 0 : i32
    return %2, %c0_i32_0 : i32, i32
  }
  func.func @transform_3(%arg0: i32, %arg1: i32) -> (i32, i32, i32) {
    %c0_i32 = arith.constant 0 : i32
    %c0_i32_0 = arith.constant 0 : i32
    %c0_i32_1 = arith.constant 0 : i32
    return %arg0, %c0_i32, %c0_i32_0 : i32, i32, i32
  }
}

</mosaic_0001>

<llo_original>
// kernel: tpu_custom_call.1
$region0: #{tpu_custom_call.1}
  #allocation0 [shape = 'u32[]', space=smem, size = 0x4, offset = 0x4, fixed_abs, tag = 'smem constant byte address 0x4 - core index']
  #allocation1 [shape = 'u32[72,128]{1,0:T(1,128)}', space=vmem, size = 0x9000, scoped, tag = 'internal scratch']
  #allocation2 [shape = 'f32[8,128]{1,0:T(8,128)}', space=vmem, size = 0x1000, scoped, tag = 'scratch operand']
  %s0 = inlined_call_operand.hbm [shape: f32[2], index: 0, kind: input, shape index: {}]
  %s1 = inlined_call_operand.hbm [shape: f32[8,128], index: 1, kind: input, shape index: {}]
  %s2 = inlined_call_operand.hbm [shape: f32[8,128], index: 2, kind: input, shape index: {}]
  %s3 = inlined_call_operand.hbm [shape: f32[2,8,128], index: 3, kind: output, shape index: {}]
  %s4 = sld [smem:[#allocation0]]
  $region73: #{tpu_custom_call.1} parent=0
    _
  %s6 = ssub.s32 1, %s4
  %s7 = scalar_select 0, %s6, %s4
  $region1: #{tpu_custom_call.1} parent=0
    #allocation3 [shape = 'u8[512]{0}', space=smem, size = 0x200, scoped, tag = 'input window, operand 0, single buffered']
    #allocation4 [shape = 's32[2]{0}', space=sflag, size = 0x8, scoped, tag = 'scoped memory for tpu_custom_call.1']
    #allocation5 [shape = 's32[2]{0}', space=sflag, size = 0x8, scoped, tag = 'scoped memory for tpu_custom_call.1']
    #allocation6 [shape = 's32[2]{0}', space=sflag, size = 0x8, scoped, tag = 'scoped memory for tpu_custom_call.1']
    #allocation7 [shape = 'u8[8192]{0}', space=vmem, size = 0x2000, scoped, tag = 'input window, operand 1']
    #allocation8 [shape = 'u8[8192]{0}', space=vmem, size = 0x2000, scoped, tag = 'input window, operand 2']
    #allocation9 [shape = 's32[2]{0}', space=sflag, size = 0x8, scoped, tag = 'scoped memory for tpu_custom_call.1']
    #allocation10 [shape = 'u8[8192]{0}', space=vmem, size = 0x2000, scoped, tag = 'output window, operand 0']
    %8 = vsyncpa [#allocation6], 0
    %9 = vsyncpa [#allocation4], 0
    %s10 = scalar_lea.sflag [#allocation4], 1
    %11 = vsyncpa %s10, 0
    %12 = vsyncpa [#allocation9], 0
    %s13 = scalar_lea.sflag [#allocation9], 1
    %14 = vsyncpa %s13, 0
    %15 = vsyncpa [#allocation5], 0
    %s16 = scalar_lea.sflag [#allocation5], 1
    %17 = vsyncpa %s16, 0
    loop: start=0, step=1, limit=4
    $region2: #{tpu_custom_call.1} parent=1 // loop_pre_header
      _
    $region3: #{tpu_custom_call.1} parent=1 // loop_header
      %s19 = sphi 0, %s23
      %p20 = scmp.ge.s32.totalorder %s19, 4
      %s26 = sphi 0, %s38
      %s27 = sphi 0, %s34
      %s28 = sphi 0, %s26
      %s29 = sphi 0, %s27
      %s30 = sphi 0, %s28
      %s31 = sphi 0, %s29
      %s39 = sphi 0, %s39
      %s41 = sphi 0, %s39
      %s42 = sphi 0, %s41
      %s56 = sphi 0, %s42
      %s68 = sphi 0, %s70
      %s71 = sphi 0, %s68
      %s72 = sphi 0, %s71
      %s88 = sphi 0, %s72
      %s100 = sphi 0, %s102
      %s103 = sphi 0, %s100
      %s104 = sphi 0, %s103
      %s120 = sphi 0, %s104
      %s126 = sphi 0, %s128
      %s129 = sphi 0, %s126
      %s130 = sphi 0, %s129
      %s146 = sphi 0, %s130
    $region4: #{tpu_custom_call.1} parent=1 // loop_header_branch
      %22 = sbr.rel (%p20) target = $region8
    $region5: #{tpu_custom_call.1} parent=1 // loop_body
      %s24 = ssub.s32 %s19, 1
      %s25 = ssub.s32 %s19, 2
      %s32 = sadd.s32 1, %s27
      %p33 = scmp.ge.s32.totalorder %s32, 1
      %s34 = scalar_select %p33, 0, %s32
      %s35 = sadd.s32 1, %s26
      %s36 = scalar_select %p33, %s35, %s26
      %p37 = scmp.ge.s32.totalorder %s36, 2
      %s38 = scalar_select %p37, 0, %s36
      %s40 = sadd.s32 %s39, 1
      %p43 = scmp.eq.s32.totalorder %s19, 1
      %p44 = scmp.ne.s32.totalorder %s39, %s41
      %p45 = scmp.eq.s32.totalorder %s19, 0
      %p46 = por %p44, %p45
      %p47 = scmp.ne.s32.totalorder %s39, %s41
      %p48 = scmp.eq.s32.totalorder %s24, 1
      %p49 = por %p47, %p48
      %p50 = scmp.ne.s32.totalorder %s41, %s42
      %p51 = scmp.eq.s32.totalorder %s24, 0
      %p52 = por %p50, %p51
      %p53 = scmp.ne.s32.totalorder %s41, %s42
      %p54 = scmp.eq.s32.totalorder %s25, 1
      %p55 = por %p53, %p54
      %p57 = scmp.ne.s32.totalorder %s42, %s56
      %p58 = scmp.eq.s32.totalorder %s25, 0
      %p59 = por %p57, %p58
      %s60 = sadd.s32 %s26, %s27
      %p61 = scmp.lt.s32.totalorder %s60, 0
      %s62 = scalar_select %p61, %s60, 0
      %s63 = sadd.s32 %s38, %s34
      %p64 = scmp.lt.s32.totalorder %s63, 0
      %s65 = scalar_select %p64, %s63, 0
      %s66 = ssub.s32 %s62, %s65
      %p67 = scmp.eq.s32.totalorder %s66, 0
      %s69 = sadd.s32 %s68, 1
      %s70 = scalar_select %p67, %s68, %s69
      %p73 = pneg %p67
      %p74 = scmp.eq.s32.totalorder %s19, 1
      %p75 = por %p73, %p74
      %p76 = scmp.ne.s32.totalorder %s68, %s71
      %p77 = scmp.eq.s32.totalorder %s19, 0
      %p78 = por %p76, %p77
      %p79 = scmp.ne.s32.totalorder %s68, %s71
      %p80 = scmp.eq.s32.totalorder %s24, 1
      %p81 = por %p79, %p80
      %p82 = scmp.ne.s32.totalorder %s71, %s72
      %p83 = scmp.eq.s32.totalorder %s24, 0
      %p84 = por %p82, %p83
      %p85 = scmp.ne.s32.totalorder %s71, %s72
      %p86 = scmp.eq.s32.totalorder %s25, 1
      %p87 = por %p85, %p86
      %p89 = scmp.ne.s32.totalorder %s72, %s88
      %p90 = scmp.eq.s32.totalorder %s25, 0
      %p91 = por %p89, %p90
      %s92 = sadd.s32 %s26, %s27
      %p93 = scmp.lt.s32.totalorder %s92, 0
      %s94 = scalar_select %p93, %s92, 0
      %s95 = sadd.s32 %s38, %s34
      %p96 = scmp.lt.s32.totalorder %s95, 0
      %s97 = scalar_select %p96, %s95, 0
      %s98 = ssub.s32 %s94, %s97
      %p99 = scmp.eq.s32.totalorder %s98, 0
      %s101 = sadd.s32 %s100, 1
      %s102 = scalar_select %p99, %s100, %s101
      %p105 = pneg %p99
      %p106 = scmp.eq.s32.totalorder %s19, 1
      %p107 = por %p105, %p106
      %p108 = scmp.ne.s32.totalorder %s100, %s103
      %p109 = scmp.eq.s32.totalorder %s19, 0
      %p110 = por %p108, %p109
      %p111 = scmp.ne.s32.totalorder %s100, %s103
      %p112 = scmp.eq.s32.totalorder %s24, 1
      %p113 = por %p111, %p112
      %p114 = scmp.ne.s32.totalorder %s103, %s104
      %p115 = scmp.eq.s32.totalorder %s24, 0
      %p116 = por %p114, %p115
      %p117 = scmp.ne.s32.totalorder %s103, %s104
      %p118 = scmp.eq.s32.totalorder %s25, 1
      %p119 = por %p117, %p118
      %p121 = scmp.ne.s32.totalorder %s104, %s120
      %p122 = scmp.eq.s32.totalorder %s25, 0
      %p123 = por %p121, %p122
      %s124 = ssub.s32 %s26, %s38
      %p125 = scmp.eq.s32.totalorder %s124, 0
      %s127 = sadd.s32 %s126, 1
      %s128 = scalar_select %p125, %s126, %s127
      %p131 = pneg %p125
      %p132 = scmp.eq.s32.totalorder %s19, 1
      %p133 = por %p131, %p132
      %p134 = scmp.ne.s32.totalorder %s126, %s129
      %p135 = scmp.eq.s32.totalorder %s19, 0
      %p136 = por %p134, %p135
      %p137 = scmp.ne.s32.totalorder %s126, %s129
      %p138 = scmp.eq.s32.totalorder %s24, 1
      %p139 = por %p137, %p138
      %p140 = scmp.ne.s32.totalorder %s129, %s130
      %p141 = scmp.eq.s32.totalorder %s24, 0
      %p142 = por %p140, %p141
      %p143 = scmp.ne.s32.totalorder %s129, %s130
      %p144 = scmp.eq.s32.totalorder %s25, 1
      %p145 = por %p143, %p144
      %p147 = scmp.ne.s32.totalorder %s130, %s146
      %p148 = scmp.eq.s32.totalorder %s25, 0
      %p149 = por %p147, %p148
      %p150 = scmp.le.s32.totalorder 1, %s19
      %p151 = scmp.lt.s32.totalorder %s19, 3
      %p152 = pnand %p150, %p151
      %p153 = pneg %p152
      // Predicated region
      $region9: #{tpu_custom_call.1} parent=5 // pred_check
        _
      $region10: #{tpu_custom_call.1} parent=5 // pred_check_branch
        %155 = sbr.rel (%p152) target = $region12
      $region11: #{tpu_custom_call.1} parent=5 // pred_region
        %s156 = ssub.s32 %s19, 1
        // Predicated region
        $region13: #{tpu_custom_call.1} parent=11 // pred_check
          %p157 = pneg %p52
        $region14: #{tpu_custom_call.1} parent=11 // pred_check_branch
          %159 = sbr.rel (%p157) target = $region16
        $region15: #{tpu_custom_call.1} parent=11 // pred_region
          %161 = vsyncadd [#allocation6], 0
          %s163 = sshll.u32 %s0, 4
          %s164 = int_to_ptr.hbm [resolvable:$true] %s163
          %166 = dma.hbm_to_smem %s164, 16, [#allocation3], [#allocation6]
        $region16: #{tpu_custom_call.1} parent=11 // pred_fallthru
          _
      $region12: #{tpu_custom_call.1} parent=5 // pred_fallthru
        _
      %p167 = scmp.lt.s32.totalorder %s19, 2
      // Predicated region
      $region17: #{tpu_custom_call.1} parent=5 // pred_check
        %p168 = pneg %p167
      $region18: #{tpu_custom_call.1} parent=5 // pred_check_branch
        %170 = sbr.rel (%p168) target = $region20
      $region19: #{tpu_custom_call.1} parent=5 // pred_region
        // Predicated region
        $region21: #{tpu_custom_call.1} parent=19 // pred_check
          %p171 = pneg %p78
        $region22: #{tpu_custom_call.1} parent=19 // pred_check_branch
          %173 = sbr.rel (%p171) target = $region24
        $region23: #{tpu_custom_call.1} parent=19 // pred_region
          %s174 = sand.u32 %s68, 1
          %s175 = scalar_lea.sflag [#allocation4], %s174
          %s176 = sand.u32 %s68, 1
          %s177 = smul.addr %s176, 8
          %s178 = scalar_lea.vmem [#allocation7], %s177
          %s179 = sadd.s32 %s26, %s27
          %p180 = scmp.lt.s32.totalorder %s179, 0
          %s181 = scalar_select %p180, %s179, 0
          %183 = vsyncadd %s175, 0
          %s184 = smul.addr %s181, 8
          %s185 = scalar_lea.hbm %s1, %s184
          %s187 = sshll.u32 %s185, 4
          %s188 = int_to_ptr.hbm [resolvable:$true] %s187
          %s189 = sshll.u32 %s178, 4
          %s190 = int_to_ptr.vmem [resolvable:$true] %s189
          %192 = dma.hbm_to_vmem [thread:$0]  %s188, 128, %s190, %s175
        $region24: #{tpu_custom_call.1} parent=19 // pred_fallthru
          _
        // Predicated region
        $region25: #{tpu_custom_call.1} parent=19 // pred_check
          %p193 = pneg %p110
        $region26: #{tpu_custom_call.1} parent=19 // pred_check_branch
          %195 = sbr.rel (%p193) target = $region28
        $region27: #{tpu_custom_call.1} parent=19 // pred_region
          %s196 = sand.u32 %s100, 1
          %s197 = scalar_lea.sflag [#allocation9], %s196
          %s198 = sand.u32 %s100, 1
          %s199 = smul.addr %s198, 8
          %s200 = scalar_lea.vmem [#allocation8], %s199
          %s201 = sadd.s32 %s26, %s27
          %p202 = scmp.lt.s32.totalorder %s201, 0
          %s203 = scalar_select %p202, %s201, 0
          %205 = vsyncadd %s197, 0
          %s206 = smul.addr %s203, 8
          %s207 = scalar_lea.hbm %s2, %s206
          %s209 = sshll.u32 %s207, 4
          %s210 = int_to_ptr.hbm [resolvable:$true] %s209
          %s211 = sshll.u32 %s200, 4
          %s212 = int_to_ptr.vmem [resolvable:$true] %s211
          %214 = dma.hbm_to_vmem [thread:$0]  %s210, 128, %s212, %s197
        $region28: #{tpu_custom_call.1} parent=19 // pred_fallthru
          _
      $region20: #{tpu_custom_call.1} parent=5 // pred_fallthru
        _
      %p215 = scmp.le.s32.totalorder 1, %s19
      %p216 = scmp.lt.s32.totalorder %s19, 3
      %p217 = pnand %p215, %p216
      %p218 = pneg %p217
      // Predicated region
      $region29: #{tpu_custom_call.1} parent=5 // pred_check
        _
      $region30: #{tpu_custom_call.1} parent=5 // pred_check_branch
        %220 = sbr.rel (%p217) target = $region32
      $region31: #{tpu_custom_call.1} parent=5 // pred_region
        %s221 = ssub.s32 %s19, 1
        // Predicated region
        $region33: #{tpu_custom_call.1} parent=31 // pred_check
          %p222 = pneg %p52
        $region34: #{tpu_custom_call.1} parent=31 // pred_check_branch
          %224 = sbr.rel (%p222) target = $region36
        $region35: #{tpu_custom_call.1} parent=31 // pred_region
          %226 = dma.done [#allocation6], 16
        $region36: #{tpu_custom_call.1} parent=31 // pred_fallthru
          _
        %s227 = sand.u32 %s71, 1
        %s228 = scalar_lea.sflag [#allocation4], %s227
        %s229 = sand.u32 %s71, 1
        %s230 = smul.addr %s229, 8
        %s231 = scalar_lea.vmem [#allocation7], %s230
        // Predicated region
        $region37: #{tpu_custom_call.1} parent=31 // pred_check
          %p232 = pneg %p84
        $region38: #{tpu_custom_call.1} parent=31 // pred_check_branch
          %234 = sbr.rel (%p232) target = $region40
        $region39: #{tpu_custom_call.1} parent=31 // pred_region
          %236 = dma.done %s228, 128
        $region40: #{tpu_custom_call.1} parent=31 // pred_fallthru
          _
        %s237 = sand.u32 %s103, 1
        %s238 = scalar_lea.sflag [#allocation9], %s237
        %s239 = sand.u32 %s103, 1
        %s240 = smul.addr %s239, 8
        %s241 = scalar_lea.vmem [#allocation8], %s240
        // Predicated region
        $region41: #{tpu_custom_call.1} parent=31 // pred_check
          %p242 = pneg %p116
        $region42: #{tpu_custom_call.1} parent=31 // pred_check_branch
          %244 = sbr.rel (%p242) target = $region44
        $region43: #{tpu_custom_call.1} parent=31 // pred_region
          %246 = dma.done %s238, 128
        $region44: #{tpu_custom_call.1} parent=31 // pred_fallthru
          _
        %247 = sfence
        %p248 = pneg %p52
        %p249 = pneg %p49
        %s250 = sand.u32 %s71, 1
        %s251 = scalar_lea.sflag [#allocation4], %s250
        %s252 = sand.u32 %s71, 1
        %s253 = smul.addr %s252, 8
        %s254 = scalar_lea.vmem [#allocation7], %s253
        %p255 = pneg %p84
        %p256 = pneg %p81
        %s257 = sand.u32 %s103, 1
        %s258 = scalar_lea.sflag [#allocation9], %s257
        %s259 = sand.u32 %s103, 1
        %s260 = smul.addr %s259, 8
        %s261 = scalar_lea.vmem [#allocation8], %s260
        %p262 = pneg %p116
        %p263 = pneg %p113
        %p264 = pneg %p142
        %p265 = pneg %p139
        %s266 = sand.u32 %s129, 1
        %s267 = scalar_lea.sflag [#allocation5], %s266
        %s268 = sand.u32 %s129, 1
        %s269 = smul.addr %s268, 8
        %s270 = scalar_lea.vmem [#allocation10], %s269
        %s271 = sadd.s32 %s28, %s29
        %p272 = scmp.lt.s32.totalorder %s271, 0
        %s273 = scalar_select %p272, %s271, 0
        %s274 = sadd.s32 %s28, %s29
        %p275 = scmp.lt.s32.totalorder %s274, 0
        %s276 = scalar_select %p275, %s274, 0
        %s277 = sadd.s32 %s28, %s29
        %p278 = scmp.eq.s32.totalorder %s29, 0
        // Predicated region
        $region45: #{tpu_custom_call.1} parent=31 // pred_check
          %p279 = pneg %p278
        $region46: #{tpu_custom_call.1} parent=31 // pred_check_branch
          %281 = sbr.rel (%p279) target = $region48
        $region47: #{tpu_custom_call.1} parent=31 // pred_region
          %282 = vst [vmem:[#allocation2] sm:$0xff] 0.0
        $region48: #{tpu_custom_call.1} parent=31 // pred_fallthru
          _
        %s283 = sld [smem:[#allocation3]]
        %s284 = sld [smem:[#allocation3 + $0x1]]
        %v285 = vld [vmem:[%s231] sm:$0xff]
        %v286 = vld [vmem:[%s241] sm:$0xff]
        %v287 = vsub.f32 0.0, %v285
        %v288 = vmax.f32 %v287, 0.0
        %v289 = vand.u32 2147483647, %v285
        %v290 = vsub.f32 0.0, %v289
        %v291 = vmul.f32 %v290, 1.442695
        %v292 = vpow.pop %v291
        %v293 = vadd.f32 %v292, 1.0
        %v294 = vlog2.pop %v293
        %v295 = vmul.f32 %v294, 0.6931472
        %v296 = vadd.f32 %v288, %v295
        %v297 = vmax.f32 %v286, 0.0
        %v298 = vand.u32 2147483647, %v286
        %v299 = vsub.f32 0.0, %v298
        %v300 = vmul.f32 %v299, 1.442695
        %v301 = vpow.pop %v300
        %v302 = vadd.f32 %v301, 1.0
        %v303 = vlog2.pop %v302
        %v304 = vmul.f32 %v303, 0.6931472
        %v305 = vadd.f32 %v297, %v304
        %v306 = vmin.f32 %v296, 23.02585
        %v307 = vmin.f32 %v305, 23.02585
        %v308 = vstv %s283
        %v309 = vmul.f32 %v308, %v306
        %v310 = vstv %s284
        %v311 = vmul.f32 %v310, %v307
        %v312 = vadd.f32 %v309, %v311
        %p313 = scmp.ge.s32.totalorder %s277, 0
        // Predicated region
        $region49: #{tpu_custom_call.1} parent=31 // pred_check
          %p314 = pneg %p313
        $region50: #{tpu_custom_call.1} parent=31 // pred_check_branch
          %316 = sbr.rel (%p314) target = $region52
        $region51: #{tpu_custom_call.1} parent=31 // pred_region
          %v317 = vlaneseq
          %v318 = vshrl.u32 %v317, 7
          %v319 = vlaneseq
          %v320 = vand.u32 %v319, 127
          %s321 = smul.u32 %s277, 8
          %v322 = vstv %s321
          %v323 = vadd.s32 %v322, %v318
          %v324 = vmul.u32 %v323, 128
          %v325 = vadd.s32 %v324, %v320
          %vm326 = vcmp.lt.s32.totalorder %v325, 300
          %v327 = vsel %vm326, %v312, 0.0
          %v328 = vld [vmem:[#allocation2] sm:$0xff]
          %v329 = vadd.f32 %v327, 0.0
          %v330 = vadd.f32 %v328, %v329
          %331 = vst [vmem:[#allocation2] sm:$0xff] %v330
        $region52: #{tpu_custom_call.1} parent=31 // pred_fallthru
          _
        %p332 = scmp.lt.s32.totalorder %s277, 0
        // Predicated region
        $region53: #{tpu_custom_call.1} parent=31 // pred_check
          %p333 = pneg %p332
        $region54: #{tpu_custom_call.1} parent=31 // pred_check_branch
          %335 = sbr.rel (%p333) target = $region56
        $region55: #{tpu_custom_call.1} parent=31 // pred_region
          %v336 = vld [vmem:[#allocation2] sm:$0xff]
          %v337 = vadd.f32 %v312, 0.0
          %v338 = vadd.f32 %v336, %v337
          %339 = vst [vmem:[#allocation2] sm:$0xff] %v338
        $region56: #{tpu_custom_call.1} parent=31 // pred_fallthru
          _
        // Predicated region
        $region57: #{tpu_custom_call.1} parent=31 // pred_check
          %p340 = pneg %p278
        $region58: #{tpu_custom_call.1} parent=31 // pred_check_branch
          %342 = sbr.rel (%p340) target = $region60
        $region59: #{tpu_custom_call.1} parent=31 // pred_region
          %v343 = vld [vmem:[#allocation2] sm:$0xff]
          %344 = vst [vmem:[%s270] sm:$0xff] %v343
        $region60: #{tpu_custom_call.1} parent=31 // pred_fallthru
          _
        %s345 = sand.u32 %s129, 1
        %s346 = scalar_lea.sflag [#allocation5], %s345
        %s347 = sand.u32 %s129, 1
        %s348 = smul.addr %s347, 8
        %s349 = scalar_lea.vmem [#allocation10], %s348
        // Predicated region
        $region61: #{tpu_custom_call.1} parent=31 // pred_check
          %p350 = pneg %p139
        $region62: #{tpu_custom_call.1} parent=31 // pred_check_branch
          %352 = sbr.rel (%p350) target = $region64
        $region63: #{tpu_custom_call.1} parent=31 // pred_region
          %354 = vsyncadd %s346, 0
          %s355 = smul.addr %s28, 8
          %s356 = scalar_lea.hbm %s3, %s355
          %s358 = sshll.u32 %s349, 4
          %s359 = int_to_ptr.vmem [resolvable:$true] %s358
          %s360 = sshll.u32 %s356, 4
          %s361 = int_to_ptr.hbm [resolvable:$true] %s360
          %363 = dma.vmem_to_hbm [thread:$0]  %s359, 128, %s361, %s346
        $region64: #{tpu_custom_call.1} parent=31 // pred_fallthru
          _
      $region32: #{tpu_custom_call.1} parent=5 // pred_fallthru
        _
      %p364 = scmp.le.s32.totalorder 2, %s19
      // Predicated region
      $region65: #{tpu_custom_call.1} parent=5 // pred_check
        %p365 = pneg %p364
      $region66: #{tpu_custom_call.1} parent=5 // pred_check_branch
        %367 = sbr.rel (%p365) target = $region68
      $region67: #{tpu_custom_call.1} parent=5 // pred_region
        %s368 = ssub.s32 %s19, 2
        // Predicated region
        $region69: #{tpu_custom_call.1} parent=67 // pred_check
          %p369 = pneg %p145
        $region70: #{tpu_custom_call.1} parent=67 // pred_check_branch
          %371 = sbr.rel (%p369) target = $region72
        $region71: #{tpu_custom_call.1} parent=67 // pred_region
          %s372 = sand.u32 %s130, 1
          %s373 = scalar_lea.sflag [#allocation5], %s372
          %s374 = sand.u32 %s130, 1
          %s375 = smul.addr %s374, 8
          %s376 = scalar_lea.vmem [#allocation10], %s375
          %378 = dma.done %s373, 128
        $region72: #{tpu_custom_call.1} parent=67 // pred_fallthru
          _
      $region68: #{tpu_custom_call.1} parent=5 // pred_fallthru
        _
    $region6: #{tpu_custom_call.1} parent=1 // loop_footer
      %s23 = sadd.s32 1, %s19
    $region7: #{tpu_custom_call.1} parent=1 // loop_footer_branch
      %18 = sbr.rel target = $region3
    $region8: #{tpu_custom_call.1} parent=1 // loop_exit
      _
    %379 = vsyncpa [#allocation4], 1
    %s380 = scalar_lea.sflag [#allocation4], 1
    %381 = vsyncpa %s380, 1
    %382 = vsyncpa [#allocation9], 1
    %s383 = scalar_lea.sflag [#allocation9], 1
    %384 = vsyncpa %s383, 1
    %385 = vsyncpa [#allocation5], 1
    %s386 = scalar_lea.sflag [#allocation5], 1
    %387 = vsyncpa %s386, 1
    %388 = vsyncpa [#allocation6], 1
    %s389 = scalar_lea.sflag [#allocation6], 1
    %390 = vsyncpa %s389, 1

</llo_original>
